<compile_context>
chip_gen: v7x
topology: tpu7x:2x2x1
jax: 0.10.0
libtpu: 0.0.40
codegen_flags: <defaults>
</compile_context>

<pallas_src>
import jax
import jax.numpy as jnp
from jax import lax
from jax.experimental import pallas as pl
from jax.experimental.pallas import tpu as pltpu


# ---------------------------------------------------------------------------
# Pallas kernel
# ---------------------------------------------------------------------------
def se_block_kernel(x_ref, w_ref, o_ref):
    """One (TB, C, HW) slab of batch items.

    x_ref : (TB, C, HW) caller dtype -- channels on sublanes, spatial on lanes
    w_ref : (2, C, Cr)  f32          -- w_ref[0] = fc1.weight.T, w_ref[1] = fc2.weight
    o_ref : (TB, C, HW) caller dtype
    """
    x = x_ref[...]                                             # (TB, C, HW)
    xf = x.astype(jnp.float32)                                 # f32 accumulation

    # squeeze: global average pool, full-width lane reduction per channel row
    mean = jnp.mean(xf, axis=-1)                               # (TB, C)

    w1t = w_ref[0]                                             # (C, Cr) = fc1.weight.T
    w2 = w_ref[1]                                              # (C, Cr) = fc2.weight

    # excite MLP, batched over TB (exact f32 broadcast-multiply + reduce):
    #   h[b, j] = relu( sum_c mean[b, c] * W1[j, c] )
    #   g[b, c] = sum_j h[b, j] * W2[c, j]
    h = jnp.sum(mean[:, :, None] * w1t[None, :, :], axis=1)    # (TB, Cr)
    h = jnp.maximum(h, 0.0)
    g = jnp.sum(h[:, None, :] * w2[None, :, :], axis=2)        # (TB, C)
    gate = 1.0 / (1.0 + jnp.exp(-g))                           # sigmoid (EUP exp)

    # scale: gate broadcast over the lane (spatial) axis; unmasked full-width store
    o_ref[...] = (xf * gate[:, :, None]).astype(o_ref.dtype)


# ---------------------------------------------------------------------------
# Wrapper
# ---------------------------------------------------------------------------
def se_block_pallas(x_nchw, w_fc1, w_fc2, *, target_tile_bytes=1 << 20):
    """x_nchw: (B, C, H, W); w_fc1: (C//r, C); w_fc2: (C, C//r) (PyTorch layouts)."""
    B, C, H, W = x_nchw.shape
    Cr = w_fc1.shape[0]
    HW = H * W

    # NCHW is contiguous as (B, C, HW): lane dim = HW.  Keep the caller dtype
    # (no f32 cast) -- the kernel is HBM-bandwidth bound.
    x = x_nchw.reshape(B, C, HW)
    # TODO(synk): C not a multiple of 8 or H*W not a multiple of 128 would need
    # tile padding; the module's default shapes (C=16, H*W=256) are aligned.

    # Single weight operand: [fc1.T ; fc2] stacked -> (2, C, Cr), f32.
    w_stack = jnp.stack(
        [w_fc1.T.astype(jnp.float32), w_fc2.astype(jnp.float32)], axis=0)

    # ---- batch-tile size ---------------------------------------------------
    itemsize = jnp.dtype(x.dtype).itemsize
    bytes_per_item = C * HW * itemsize
    tb = max(1, target_tile_bytes // bytes_per_item)   # ~1 MiB x tile per step
    if B >= 2:
        tb = min(tb, max(1, B // 2))   # keep >= 2 parallel steps (v7x: 2 TCs)
    tb = min(tb, B)
    # VMEM budget: 2 buffers x (in + out) x tile <= ~4 MiB at the 1 MiB target,
    # inside the v5e 16 MiB / v7x 32 MiB scoped defaults -> no vmem_limit_bytes.

    num_blocks = pl.cdiv(B, tb)
    b_pad = num_blocks * tb
    if b_pad != B:
        x = jnp.pad(x, ((0, b_pad - B), (0, 0), (0, 0)))

    out = pl.pallas_call(
        se_block_kernel,
        out_shape=jax.ShapeDtypeStruct((b_pad, C, HW), x.dtype),
        grid_spec=pltpu.PrefetchScalarGridSpec(
            num_scalar_prefetch=0,
            grid=(num_blocks,),
            in_specs=[
                pl.BlockSpec((tb, C, HW), lambda i: (i, 0, 0)),
                pl.BlockSpec((2, C, Cr), lambda i: (0, 0, 0)),
            ],
            out_specs=pl.BlockSpec((tb, C, HW), lambda i: (i, 0, 0)),
        ),
        compiler_params=pltpu.CompilerParams(
            dimension_semantics=("parallel",)),
    )(x, w_stack)

    return out[:B].reshape(B, C, H, W)


# ---------------------------------------------------------------------------
# Pure-JAX reference (for correctness check)
# ---------------------------------------------------------------------------
def se_block_ref(x, w_fc1, w_fc2):
    y = jnp.mean(x.astype(jnp.float32), axis=(2, 3))                         # (B, C)
    y = jnp.maximum(jnp.dot(y, w_fc1.T, precision=lax.Precision.HIGHEST), 0.0)
    y = jax.nn.sigmoid(jnp.dot(y, w_fc2.T, precision=lax.Precision.HIGHEST))
    return (x.astype(jnp.float32) * y[:, :, None, None]).astype(x.dtype)


if __name__ == "__main__":
    key = jax.random.PRNGKey(0)
    kx, k1, k2 = jax.random.split(key, 3)

    # Module defaults: inchannel=16, ratio=4.
    B, C, H, W = 2, 16, 16, 16
    Cr = C // 4
    x = jax.random.normal(kx, (B, C, H, W), jnp.float32)
    w_fc1 = jax.random.normal(k1, (Cr, C), jnp.float32) * 0.1   # fc1: (C//r, C), no bias
    w_fc2 = jax.random.normal(k2, (C, Cr), jnp.float32) * 0.1   # fc2: (C, C//r), no bias

    out = se_block_pallas(x, w_fc1, w_fc2)
    out = jax.block_until_ready(out)

    ref = se_block_ref(x, w_fc1, w_fc2)
    err = float(jnp.max(jnp.abs(out - ref)))
    assert out.shape == (B, C, H, W)
    assert err < 1e-4, f"max abs error {err}"
    print("KERNEL_OK")
</pallas_src>

<mosaic_0001>
module attributes {stable_mosaic.version = 11 : i64} {
  func.func @se_block_kernel(%arg0: i32, %arg1: memref<1x16x256xf32, #tpu.memory_space<vmem>>, %arg2: memref<2x16x4xf32, #tpu.memory_space<vmem>>, %arg3: memref<1x16x256xf32, #tpu.memory_space<vmem>>) attributes {dimension_semantics = [#tpu.dimension_semantics<parallel>], iteration_bounds = array<i64: 2>, scalar_prefetch = 0 : i64, scratch_operands = 0 : i64, tpu.core_type = #tpu.core_type<tc>, window_params = [{transform_indices = @transform_0, window_bounds = array<i64: 1, 16, 256>}, {pipeline_mode = #tpu.pipeline_mode<synchronous>, transform_indices = @transform_1, window_bounds = array<i64: 2, 16, 4>}, {transform_indices = @transform_2, window_bounds = array<i64: 1, 16, 256>}]} {
    %c0 = arith.constant 0 : index
    %c0_0 = arith.constant 0 : index
    %c0_1 = arith.constant 0 : index
    %0 = vector.load %arg1[%c0, %c0_0, %c0_1] : memref<1x16x256xf32, #tpu.memory_space<vmem>>, vector<1x16x256xf32>
    %cst = arith.constant dense<0.000000e+00> : vector<1x16xf32>
    %1 = vector.multi_reduction <add>, %0, %cst [2] : vector<1x16x256xf32> to vector<1x16xf32>
    %cst_2 = arith.constant 2.560000e+02 : f32
    %2 = vector.broadcast %cst_2 : f32 to vector<1x16xf32>
    %3 = arith.divf %1, %2 : vector<1x16xf32>
    %c0_3 = arith.constant 0 : index
    %c0_4 = arith.constant 0 : index
    %c0_5 = arith.constant 0 : index
    %4 = vector.load %arg2[%c0_3, %c0_4, %c0_5] : memref<2x16x4xf32, #tpu.memory_space<vmem>>, vector<1x16x4xf32>
    %5 = vector.shape_cast %4 : vector<1x16x4xf32> to vector<16x4xf32>
    %c1 = arith.constant 1 : index
    %c0_6 = arith.constant 0 : index
    %c0_7 = arith.constant 0 : index
    %6 = vector.load %arg2[%c1, %c0_6, %c0_7] : memref<2x16x4xf32, #tpu.memory_space<vmem>>, vector<1x16x4xf32>
    %7 = vector.shape_cast %6 : vector<1x16x4xf32> to vector<16x4xf32>
    %8 = vector.shape_cast %3 : vector<1x16xf32> to vector<1x16x1xf32>
    %9 = vector.shape_cast %5 : vector<16x4xf32> to vector<1x16x4xf32>
    %10 = vector.broadcast %8 : vector<1x16x1xf32> to vector<1x16x4xf32>
    %11 = arith.mulf %10, %9 : vector<1x16x4xf32>
    %cst_8 = arith.constant dense<0.000000e+00> : vector<1x4xf32>
    %12 = vector.multi_reduction <add>, %11, %cst_8 [1] : vector<1x16x4xf32> to vector<1x4xf32>
    %cst_9 = arith.constant 0.000000e+00 : f32
    %13 = vector.broadcast %cst_9 : f32 to vector<1x4xf32>
    %14 = arith.maximumf %12, %13 : vector<1x4xf32>
    %15 = vector.shape_cast %14 : vector<1x4xf32> to vector<1x1x4xf32>
    %16 = vector.shape_cast %7 : vector<16x4xf32> to vector<1x16x4xf32>
    %17 = vector.broadcast %15 : vector<1x1x4xf32> to vector<1x16x4xf32>
    %18 = arith.mulf %17, %16 : vector<1x16x4xf32>
    %cst_10 = arith.constant dense<0.000000e+00> : vector<1x16xf32>
    %19 = vector.multi_reduction <add>, %18, %cst_10 [2] : vector<1x16x4xf32> to vector<1x16xf32>
    %cst_11 = arith.constant 0.000000e+00 : f32
    %20 = vector.broadcast %cst_11 : f32 to vector<1x16xf32>
    %21 = arith.subf %20, %19 : vector<1x16xf32>
    %22 = math.exp %21 : vector<1x16xf32>
    %cst_12 = arith.constant 1.000000e+00 : f32
    %23 = vector.broadcast %cst_12 : f32 to vector<1x16xf32>
    %24 = arith.addf %23, %22 : vector<1x16xf32>
    %cst_13 = arith.constant 1.000000e+00 : f32
    %25 = vector.broadcast %cst_13 : f32 to vector<1x16xf32>
    %26 = arith.divf %25, %24 : vector<1x16xf32>
    %27 = vector.shape_cast %26 : vector<1x16xf32> to vector<1x16x1xf32>
    %28 = vector.broadcast %27 : vector<1x16x1xf32> to vector<1x16x256xf32>
    %29 = arith.mulf %0, %28 : vector<1x16x256xf32>
    %c0_14 = arith.constant 0 : index
    %c0_15 = arith.constant 0 : index
    %c0_16 = arith.constant 0 : index
    %30 = vector.load %arg3[%c0_14, %c0_15, %c0_16] : memref<1x16x256xf32, #tpu.memory_space<vmem>>, vector<1x16x256xf32>
    tpu.vector_store %arg3[%c0_14, %c0_15, %c0_16], %29 {strides = array<i32>} : memref<1x16x256xf32, #tpu.memory_space<vmem>>, vector<1x16x256xf32>,
    return
  }
  func.func @transform_0(%arg0: i32) -> (i32, i32, i32) {
    %c0_i32 = arith.constant 0 : i32
    %c0_i32_0 = arith.constant 0 : i32
    %c0_i32_1 = arith.constant 0 : i32
    return %arg0, %c0_i32, %c0_i32_0 : i32, i32, i32
  }
  func.func @transform_1(%arg0: i32) -> (i32, i32, i32) {
    %c0_i32 = arith.constant 0 : i32
    %c0_i32_0 = arith.constant 0 : i32
    %c0_i32_1 = arith.constant 0 : i32
    %c0_i32_2 = arith.constant 0 : i32
    return %c0_i32, %c0_i32_0, %c0_i32_1 : i32, i32, i32
  }
  func.func @transform_2(%arg0: i32) -> (i32, i32, i32) {
    %c0_i32 = arith.constant 0 : i32
    %c0_i32_0 = arith.constant 0 : i32
    %c0_i32_1 = arith.constant 0 : i32
    return %arg0, %c0_i32, %c0_i32_0 : i32, i32, i32
  }
}

</mosaic_0001>

<llo_original>
// kernel: tpu_custom_call.1
$region0: #{tpu_custom_call.1}
  #allocation0 [shape = 'u32[]', space=smem, size = 0x4, offset = 0x4, fixed_abs, tag = 'smem constant byte address 0x4 - core index']
  #allocation1 [shape = 'u32[144,128]{1,0:T(1,128)}', space=vmem, size = 0x12000, scoped, tag = 'internal scratch']
  %s0 = inlined_call_operand.hbm [shape: f32[2,16,256], index: 0, kind: input, shape index: {}]
  %s1 = inlined_call_operand.vmem [shape: f32[2,16,4], index: 1, kind: input, shape index: {}]
  %s2 = inlined_call_operand.hbm [shape: f32[2,16,256], index: 2, kind: output, shape index: {}]
  %s3 = sld [smem:[#allocation0]]
  $region45: #{tpu_custom_call.1} parent=0
    _
  %s5 = ssub.s32 1, %s3
  %s6 = scalar_select 0, %s5, %s3
  $region1: #{tpu_custom_call.1} parent=0
    #allocation2 [shape = 'u8[32768]{0}', space=vmem, size = 0x8000, scoped, tag = 'input window, operand 0']
    #allocation3 [shape = 's32[2]{0}', space=sflag, size = 0x8, scoped, tag = 'scoped memory for tpu_custom_call.1']
    #allocation4 [shape = 's32[2]{0}', space=sflag, size = 0x8, scoped, tag = 'scoped memory for tpu_custom_call.1']
    #allocation5 [shape = 'u8[32768]{0}', space=vmem, size = 0x8000, scoped, tag = 'output window, operand 0']
    %7 = vsyncpa [#allocation3], 0
    %s8 = scalar_lea.sflag [#allocation3], 1
    %9 = vsyncpa %s8, 0
    %10 = vsyncpa [#allocation4], 0
    %s11 = scalar_lea.sflag [#allocation4], 1
    %12 = vsyncpa %s11, 0
    loop: start=0, step=1, limit=4
    $region2: #{tpu_custom_call.1} parent=1 // loop_pre_header
      _
    $region3: #{tpu_custom_call.1} parent=1 // loop_header
      %s14 = sphi 0, %s18
      %p15 = scmp.ge.s32.totalorder %s14, 4
      %s24 = sphi 0, %s26
      %s27 = sphi 0, %s24
      %s28 = sphi 0, %s27
      %s44 = sphi 0, %s28
      %s48 = sphi 0, %s48
      %s50 = sphi 0, %s48
      %s51 = sphi 0, %s50
      %s65 = sphi 0, %s51
      %s71 = sphi 0, %s73
      %s74 = sphi 0, %s71
      %s75 = sphi 0, %s74
      %s91 = sphi 0, %s75
    $region4: #{tpu_custom_call.1} parent=1 // loop_header_branch
      %17 = sbr.rel (%p15) target = $region8
    $region5: #{tpu_custom_call.1} parent=1 // loop_body
      %s19 = ssub.s32 %s14, 1
      %s20 = ssub.s32 %s14, 2
      %s21 = sadd.s32 %s14, 1
      %s22 = ssub.s32 %s14, %s21
      %p23 = scmp.eq.s32.totalorder %s22, 0
      %s25 = sadd.s32 %s24, 1
      %s26 = scalar_select %p23, %s24, %s25
      %p29 = pneg %p23
      %p30 = scmp.eq.s32.totalorder %s14, 1
      %p31 = por %p29, %p30
      %p32 = scmp.ne.s32.totalorder %s24, %s27
      %p33 = scmp.eq.s32.totalorder %s14, 0
      %p34 = por %p32, %p33
      %p35 = scmp.ne.s32.totalorder %s24, %s27
      %p36 = scmp.eq.s32.totalorder %s19, 1
      %p37 = por %p35, %p36
      %p38 = scmp.ne.s32.totalorder %s27, %s28
      %p39 = scmp.eq.s32.totalorder %s19, 0
      %p40 = por %p38, %p39
      %p41 = scmp.ne.s32.totalorder %s27, %s28
      %p42 = scmp.eq.s32.totalorder %s20, 1
      %p43 = por %p41, %p42
      %p45 = scmp.ne.s32.totalorder %s28, %s44
      %p46 = scmp.eq.s32.totalorder %s20, 0
      %p47 = por %p45, %p46
      %s49 = sadd.s32 %s48, 1
      %p52 = scmp.eq.s32.totalorder %s14, 1
      %p53 = scmp.ne.s32.totalorder %s48, %s50
      %p54 = scmp.eq.s32.totalorder %s14, 0
      %p55 = por %p53, %p54
      %p56 = scmp.ne.s32.totalorder %s48, %s50
      %p57 = scmp.eq.s32.totalorder %s19, 1
      %p58 = por %p56, %p57
      %p59 = scmp.ne.s32.totalorder %s50, %s51
      %p60 = scmp.eq.s32.totalorder %s19, 0
      %p61 = por %p59, %p60
      %p62 = scmp.ne.s32.totalorder %s50, %s51
      %p63 = scmp.eq.s32.totalorder %s20, 1
      %p64 = por %p62, %p63
      %p66 = scmp.ne.s32.totalorder %s51, %s65
      %p67 = scmp.eq.s32.totalorder %s20, 0
      %p68 = por %p66, %p67
      %s69 = ssub.s32 %s14, %s21
      %p70 = scmp.eq.s32.totalorder %s69, 0
      %s72 = sadd.s32 %s71, 1
      %s73 = scalar_select %p70, %s71, %s72
      %p76 = pneg %p70
      %p77 = scmp.eq.s32.totalorder %s14, 1
      %p78 = por %p76, %p77
      %p79 = scmp.ne.s32.totalorder %s71, %s74
      %p80 = scmp.eq.s32.totalorder %s14, 0
      %p81 = por %p79, %p80
      %p82 = scmp.ne.s32.totalorder %s71, %s74
      %p83 = scmp.eq.s32.totalorder %s19, 1
      %p84 = por %p82, %p83
      %p85 = scmp.ne.s32.totalorder %s74, %s75
      %p86 = scmp.eq.s32.totalorder %s19, 0
      %p87 = por %p85, %p86
      %p88 = scmp.ne.s32.totalorder %s74, %s75
      %p89 = scmp.eq.s32.totalorder %s20, 1
      %p90 = por %p88, %p89
      %p92 = scmp.ne.s32.totalorder %s75, %s91
      %p93 = scmp.eq.s32.totalorder %s20, 0
      %p94 = por %p92, %p93
      %p95 = scmp.le.s32.totalorder 1, %s14
      %p96 = scmp.lt.s32.totalorder %s14, 3
      %p97 = pnand %p95, %p96
      %p98 = pneg %p97
      // Predicated region
      $region9: #{tpu_custom_call.1} parent=5 // pred_check
        _
      $region10: #{tpu_custom_call.1} parent=5 // pred_check_branch
        %100 = sbr.rel (%p97) target = $region12
      $region11: #{tpu_custom_call.1} parent=5 // pred_region
        %s101 = ssub.s32 %s14, 1
        // Predicated region
        $region13: #{tpu_custom_call.1} parent=11 // pred_check
          %p102 = pneg %p61
        $region14: #{tpu_custom_call.1} parent=11 // pred_check_branch
          %104 = sbr.rel (%p102) target = $region16
        $region15: #{tpu_custom_call.1} parent=11 // pred_region
          _
        $region16: #{tpu_custom_call.1} parent=11 // pred_fallthru
          _
      $region12: #{tpu_custom_call.1} parent=5 // pred_fallthru
        _
      %p105 = scmp.lt.s32.totalorder %s14, 2
      // Predicated region
      $region17: #{tpu_custom_call.1} parent=5 // pred_check
        %p106 = pneg %p105
      $region18: #{tpu_custom_call.1} parent=5 // pred_check_branch
        %108 = sbr.rel (%p106) target = $region20
      $region19: #{tpu_custom_call.1} parent=5 // pred_region
        // Predicated region
        $region21: #{tpu_custom_call.1} parent=19 // pred_check
          %p109 = pneg %p34
        $region22: #{tpu_custom_call.1} parent=19 // pred_check_branch
          %111 = sbr.rel (%p109) target = $region24
        $region23: #{tpu_custom_call.1} parent=19 // pred_region
          %s112 = sand.u32 %s24, 1
          %s113 = scalar_lea.sflag [#allocation3], %s112
          %s114 = sand.u32 %s24, 1
          %s115 = smul.addr %s114, 32
          %s116 = scalar_lea.vmem [#allocation2], %s115
          %s118 = ssub.s32 512, 512
          %119 = vsyncadd %s113, %s118
          %s120 = smul.addr %s14, 4
          %s121 = smul.addr %s120, 128
          %s122 = scalar_lea.hbm %s0, %s121
          %s123 = sshll.u32 %s116, 4
          %s124 = int_to_ptr.vmem [resolvable:$true] %s123
          %129 = dma.hbm_to_vmem [thread:$0]  %s122, 512, %s124, %s113, 256, 256, 16
        $region24: #{tpu_custom_call.1} parent=19 // pred_fallthru
          _
      $region20: #{tpu_custom_call.1} parent=5 // pred_fallthru
        _
      %p130 = scmp.le.s32.totalorder 1, %s14
      %p131 = scmp.lt.s32.totalorder %s14, 3
      %p132 = pnand %p130, %p131
      %p133 = pneg %p132
      // Predicated region
      $region25: #{tpu_custom_call.1} parent=5 // pred_check
        _
      $region26: #{tpu_custom_call.1} parent=5 // pred_check_branch
        %135 = sbr.rel (%p132) target = $region28
      $region27: #{tpu_custom_call.1} parent=5 // pred_region
        %s136 = ssub.s32 %s14, 1
        %s137 = sand.u32 %s27, 1
        %s138 = scalar_lea.sflag [#allocation3], %s137
        %s139 = sand.u32 %s27, 1
        %s140 = smul.addr %s139, 32
        %s141 = scalar_lea.vmem [#allocation2], %s140
        // Predicated region
        $region29: #{tpu_custom_call.1} parent=27 // pred_check
          %p142 = pneg %p40
        $region30: #{tpu_custom_call.1} parent=27 // pred_check_branch
          %144 = sbr.rel (%p142) target = $region32
        $region31: #{tpu_custom_call.1} parent=27 // pred_region
          %145 = dma.done %s138, 512
        $region32: #{tpu_custom_call.1} parent=27 // pred_fallthru
          _
        %s146 = sand.u32 %s27, 1
        %s147 = scalar_lea.sflag [#allocation3], %s146
        %s148 = sand.u32 %s27, 1
        %s149 = smul.addr %s148, 32
        %s150 = scalar_lea.vmem [#allocation2], %s149
        %p151 = pneg %p40
        %p152 = pneg %p37
        %p153 = pneg %p61
        %p154 = pneg %p58
        %p155 = pneg %p87
        %p156 = pneg %p84
        %s157 = sand.u32 %s74, 1
        %s158 = scalar_lea.sflag [#allocation4], %s157
        %s159 = sand.u32 %s74, 1
        %s160 = smul.addr %s159, 32
        %s161 = scalar_lea.vmem [#allocation5], %s160
        %v162 = vld [vmem:[%s141] sm:$0xff]
        %v163 = vld [vmem:[%s141 + $0x8] sm:$0xff]
        %v164 = vld [vmem:[%s141 + $0x10] sm:$0xff]
        %v165 = vld [vmem:[%s141 + $0x18] sm:$0xff]
        %v166 = vadd.f32 %v162, %v163
        %167 = vadd.xlane.f32.xlu0 %v166
        %v168 = vpop.xlane.xlu0 %167
        %v169 = vadd.f32 %v164, %v165
        %170 = vadd.xlane.f32.xlu0 %v169
        %v171 = vpop.xlane.xlu0 %170
        %v172 = vrcp.pop 256.0
        %v173 = vmul.f32 %v168, %v172
        %v174 = vmul.f32 %v171, %v172
        %v175 = vld [vmem:[%s1] sm:$0xff]
        %v176 = vld [vmem:[%s1 + $0x8] sm:$0xff]
        %s177 = scalar_lea.vmem %s1, 16
        %v178 = vld [vmem:[%s177] sm:$0xff]
        %v179 = vld [vmem:[%s177 + $0x8] sm:$0xff]
        %v180 = vmul.f32 %v173, %v175
        %v181 = vmul.f32 %v174, %v176
        %vm182 = vcmask 31744
        %v183 = vsel %vm182, %v180, 0.0
        %v184 = vsel %vm182, %v181, 0.0
        %v185 = vadd.f32 %v183, %v184
        %v186 = vrot.slane %v185, 4
        %v187 = vadd.f32 %v185, %v186
        %v188 = vrot.slane %v187, 2
        %v189 = vadd.f32 %v187, %v188
        %v190 = vrot.slane %v189, 1
        %v191 = vadd.f32 %v189, %v190
        %v192 = vmax.f32 %v191, 0.0
        %v193 = vmul.f32 %v192, %v178
        %v194 = vmul.f32 %v192, %v179
        %v195 = vsel %vm182, %v193, 0.0
        %196 = vadd.xlane.f32.xlu0 %v195
        %v197 = vpop.xlane.xlu0 %196
        %v198 = vsel %vm182, %v194, 0.0
        %199 = vadd.xlane.f32.xlu0 %v198
        %v200 = vpop.xlane.xlu0 %199
        %v201 = vsub.f32 0.0, %v197
        %v202 = vsub.f32 0.0, %v200
        %v203 = vmul.f32 %v201, 1.442695
        %v204 = vpow.pop %v203
        %v205 = vmul.f32 %v202, 1.442695
        %v206 = vpow.pop %v205
        %v207 = vadd.f32 %v204, 1.0
        %v208 = vadd.f32 %v206, 1.0
        %v209 = vrcp.pop %v207
        %v210 = vmul.f32 1.0, %v209
        %v211 = vrcp.pop %v208
        %v212 = vmul.f32 1.0, %v211
        %v213 = vmul.f32 %v162, %v210
        %v214 = vmul.f32 %v163, %v210
        %v215 = vmul.f32 %v164, %v212
        %v216 = vmul.f32 %v165, %v212
        %217 = vst [vmem:[%s161] sm:$0xff] %v213
        %218 = vst [vmem:[%s161 + $0x8] sm:$0xff] %v214
        %219 = vst [vmem:[%s161 + $0x10] sm:$0xff] %v215
        %220 = vst [vmem:[%s161 + $0x18] sm:$0xff] %v216
        %s221 = sand.u32 %s74, 1
        %s222 = scalar_lea.sflag [#allocation4], %s221
        %s223 = sand.u32 %s74, 1
        %s224 = smul.addr %s223, 32
        %s225 = scalar_lea.vmem [#allocation5], %s224
        // Predicated region
        $region33: #{tpu_custom_call.1} parent=27 // pred_check
          %p226 = pneg %p84
        $region34: #{tpu_custom_call.1} parent=27 // pred_check_branch
          %228 = sbr.rel (%p226) target = $region36
        $region35: #{tpu_custom_call.1} parent=27 // pred_region
          %s230 = ssub.s32 512, 512
          %231 = vsyncadd %s222, %s230
          %s232 = smul.addr %s19, 4
          %s233 = smul.addr %s232, 128
          %s234 = scalar_lea.hbm %s2, %s233
          %s235 = sshll.u32 %s225, 4
          %s236 = int_to_ptr.vmem [resolvable:$true] %s235
          %241 = dma.vmem_to_hbm [thread:$0]  %s236, 512, %s234, %s222, 256, 256, 16
        $region36: #{tpu_custom_call.1} parent=27 // pred_fallthru
          _
      $region28: #{tpu_custom_call.1} parent=5 // pred_fallthru
        _
      %p242 = scmp.le.s32.totalorder 2, %s14
      // Predicated region
      $region37: #{tpu_custom_call.1} parent=5 // pred_check
        %p243 = pneg %p242
      $region38: #{tpu_custom_call.1} parent=5 // pred_check_branch
        %245 = sbr.rel (%p243) target = $region40
      $region39: #{tpu_custom_call.1} parent=5 // pred_region
        %s246 = ssub.s32 %s14, 2
        // Predicated region
        $region41: #{tpu_custom_call.1} parent=39 // pred_check
          %p247 = pneg %p90
        $region42: #{tpu_custom_call.1} parent=39 // pred_check_branch
          %249 = sbr.rel (%p247) target = $region44
        $region43: #{tpu_custom_call.1} parent=39 // pred_region
          %s250 = sand.u32 %s75, 1
          %s251 = scalar_lea.sflag [#allocation4], %s250
          %s252 = sand.u32 %s75, 1
          %s253 = smul.addr %s252, 32
          %s254 = scalar_lea.vmem [#allocation5], %s253
          %255 = dma.done %s251, 512
        $region44: #{tpu_custom_call.1} parent=39 // pred_fallthru
          _
      $region40: #{tpu_custom_call.1} parent=5 // pred_fallthru
        _
    $region6: #{tpu_custom_call.1} parent=1 // loop_footer
      %s18 = sadd.s32 1, %s14
    $region7: #{tpu_custom_call.1} parent=1 // loop_footer_branch
      %13 = sbr.rel target = $region3
    $region8: #{tpu_custom_call.1} parent=1 // loop_exit
      _
    %256 = vsyncpa [#allocation3], 1
    %s257 = scalar_lea.sflag [#allocation3], 1
    %258 = vsyncpa %s257, 1
    %259 = vsyncpa [#allocation4], 1
    %s260 = scalar_lea.sflag [#allocation4], 1
    %261 = vsyncpa %s260, 1

</llo_original>
